<compile_context>
chip_gen: v7x
topology: tpu7x:2x2x1
jax: 0.10.0
libtpu: 0.0.40
codegen_flags: <defaults>
</compile_context>

<pallas_src>
import math

import jax
import jax.numpy as jnp
from jax import lax
from jax.experimental import pallas as pl
from jax.experimental.pallas import tpu as pltpu


# ---------------------------------------------------------------------------
# Reference table construction (mirrors SinusoidalPositionalEmbedding.get_embedding)
# Used only by the pure-JAX reference below; the kernel is analytic.
# ---------------------------------------------------------------------------
def get_embedding(num_embeddings, embedding_dim, padding_idx=None):
    half_dim = embedding_dim // 2
    scale = math.log(10000.0) / (half_dim - 1)
    inv_freq = jnp.exp(jnp.arange(half_dim, dtype=jnp.float32) * -scale)
    ang = jnp.arange(num_embeddings, dtype=jnp.float32)[:, None] * inv_freq[None, :]
    emb = jnp.concatenate([jnp.sin(ang), jnp.cos(ang)], axis=1).reshape(
        num_embeddings, -1
    )
    if embedding_dim % 2 == 1:
        emb = jnp.concatenate(
            [emb, jnp.zeros((num_embeddings, 1), jnp.float32)], axis=1
        )
    if padding_idx is not None:
        emb = emb.at[padding_idx, :].set(0.0)
    return emb


# ---------------------------------------------------------------------------
# Pallas kernel
# ---------------------------------------------------------------------------
def _make_kernel(padding_idx: int, chunk_rows: int, n_chunks: int):
    pad_f = float(padding_idx)

    def kernel(tok_ref, freq_ref, phase_ref, tri_ref, uge_ref, ueq_ref,
               out_ref, carry_ref):
        # Reset the running non-pad count at the start of every batch row.
        # padding_idx is folded into the carry so positions == count directly.
        @pl.when(pl.program_id(1) == 0)
        def _():
            carry_ref[...] = jnp.full_like(carry_ref, pad_f)

        freq = freq_ref[...]       # (1, GD)  per-lane inverse frequency
        phase = phase_ref[...]     # (1, GD)  0 for sin half, pi/2 for cos half
        tri = tri_ref[...]         # (chunk_rows, chunk_rows) strict lower triangle
        u_ge = uge_ref[...]        # (G, GD): 1 if g <= lane // D
        u_eq = ueq_ref[...]        # (G, GD): 1 if g == lane // D

        def chunk_body(c, carry):
            row0 = pl.multiple_of(c * chunk_rows, 8)
            tok = tok_ref[pl.ds(row0, chunk_rows), :]               # (chunk_rows, G)
            mask_f = (tok != padding_idx).astype(jnp.float32)       # (chunk_rows, G)

            # ---- tiled cumsum of the non-pad mask (exact: 0/1 data, f32 MXU) ----
            row_tot = jnp.sum(mask_f, axis=1, keepdims=True)        # (chunk_rows, 1)
            prev_rows = jnp.dot(tri, row_tot,
                                preferred_element_type=jnp.float32)     # exclusive row cumsum
            incl = jnp.dot(mask_f, u_ge,
                           preferred_element_type=jnp.float32)          # within-row inclusive
            mask_dense = jnp.dot(mask_f, u_eq,
                                 preferred_element_type=jnp.float32)    # per-lane non-pad mask

            pos = carry + prev_rows + incl                          # (chunk_rows, GD)

            # ---- analytic sinusoid: single EUP sin, cos via +pi/2 phase --------
            emb = jnp.sin(pos * freq + phase)
            out_ref[pl.ds(row0, chunk_rows), :] = emb * mask_dense

            # Carry the total non-pad count of this chunk forward.
            return carry + jnp.sum(row_tot, axis=0, keepdims=True)

        carry = lax.fori_loop(0, n_chunks, chunk_body, carry_ref[...],
                              unroll=True)
        carry_ref[...] = carry

    return kernel


def _round_up(x, m):
    return ((x + m - 1) // m) * m


def sinusoidal_positional_embedding(tokens, embedding_dim=32, init_size=1024,
                                    padding_idx=0):
    """Pallas equivalent of SinusoidalPositionalEmbedding(embedding_dim).forward(tokens)."""
    bsz, seq_len = tokens.shape
    D = embedding_dim
    half = D // 2
    # embedding_dim in {1,2,3} divides by (half_dim - 1) <= 0 in the reference formula.
    assert half > 1, "embedding_dim must be >= 4 (reference formula divides by half_dim-1)"
    del init_size  # analytic sinusoid supports any position (matches lazy table regrow)

    # Lane packing: G tokens per output row so stores are 128-lane dense when possible.
    if D <= 128 and 128 % D == 0:
        G = 128 // D
    else:
        G = 1  # TODO(synk): lane-dense packing for D that does not divide 128
    GD = G * D

    # Tiling: chunk_rows is the in-kernel cumsum-triangle size; n_chunks chunks per
    # grid step (~4096 tokens) amortize the ~0.35us fixed per-step overhead.
    rows_total = pl.cdiv(seq_len, G)
    chunk_rows = min(256, _round_up(rows_total, 8))
    target_rows = max(chunk_rows, 4096 // G)
    n_chunks = max(1, min(target_rows // chunk_rows, pl.cdiv(rows_total, chunk_rows)))
    rows_per_step = chunk_rows * n_chunks
    rows_padded = _round_up(rows_total, rows_per_step)
    n_outer = rows_padded // rows_per_step
    seq_padded = rows_padded * G

    # Pad with padding_idx: padded slots have mask 0, add 0 to the cumsum, and
    # produce zero embeddings that are sliced off below (no degenerate fallback).
    tok_padded = tokens.astype(jnp.int32)
    if seq_padded != seq_len:
        tok_padded = jnp.pad(tok_padded, ((0, 0), (0, seq_padded - seq_len)),
                             constant_values=padding_idx)
    tok_packed = tok_padded.reshape(bsz, rows_padded, G)

    # ---- host-side constants, all resident in VMEM across the whole grid ----
    scale = math.log(10000.0) / (half - 1)
    inv_freq = jnp.exp(jnp.arange(half, dtype=jnp.float32) * -scale)      # (half,)
    zpad = [jnp.zeros((1,), jnp.float32)] if D % 2 == 1 else []
    freq_d = jnp.concatenate([inv_freq, inv_freq] + zpad)                  # (D,)
    phase_d = jnp.concatenate([jnp.zeros((half,), jnp.float32),
                               jnp.full((half,), math.pi / 2, jnp.float32)] + zpad)
    freq_row = jnp.tile(freq_d, (G,))[None, :]                             # (1, GD)
    phase_row = jnp.tile(phase_d, (G,))[None, :]                           # (1, GD)

    # Strict lower triangle for the exclusive cumsum of per-row totals.
    tri = jnp.tril(jnp.ones((chunk_rows, chunk_rows), jnp.float32), k=-1)
    # (G, GD) selectors mapping packed-token masks to lanes on the MXU:
    #   U_ge[g, lane] = 1 if g <= lane // D   (within-row inclusive cumsum)
    #   U_eq[g, lane] = 1 if g == lane // D   (per-lane non-pad mask)
    g_idx = jnp.arange(G, dtype=jnp.int32)[:, None]                        # (G, 1)
    lane_grp = (jnp.arange(GD, dtype=jnp.int32) // D)[None, :]             # (1, GD)
    u_ge = (g_idx <= lane_grp).astype(jnp.float32)
    u_eq = (g_idx == lane_grp).astype(jnp.float32)

    cost = pl.CostEstimate(
        flops=int(bsz * n_outer * n_chunks
                  * (2 * chunk_rows * chunk_rows + 4 * chunk_rows * G * GD
                     + 4 * chunk_rows * GD)),
        transcendentals=int(bsz * seq_padded * D),
        bytes_accessed=int(4 * bsz * seq_padded * (1 + D)),
    )

    out_packed = pl.pallas_call(
        _make_kernel(padding_idx, chunk_rows, n_chunks),
        out_shape=jax.ShapeDtypeStruct((bsz, rows_padded, GD), jnp.float32),
        grid=(bsz, n_outer),
        in_specs=[
            pl.BlockSpec((None, rows_per_step, G), lambda b, s: (b, s, 0)),  # packed tokens
            pl.BlockSpec((1, GD), lambda b, s: (0, 0)),                      # inv_freq row
            pl.BlockSpec((1, GD), lambda b, s: (0, 0)),                      # phase row
            pl.BlockSpec((chunk_rows, chunk_rows), lambda b, s: (0, 0)),     # strict lower tri
            pl.BlockSpec((G, GD), lambda b, s: (0, 0)),                      # U_ge selector
            pl.BlockSpec((G, GD), lambda b, s: (0, 0)),                      # U_eq selector
        ],
        out_specs=pl.BlockSpec((None, rows_per_step, GD), lambda b, s: (b, s, 0)),
        scratch_shapes=[pltpu.VMEM((1, 1), jnp.float32)],                    # running count
        compiler_params=pltpu.CompilerParams(
            dimension_semantics=("parallel", "arbitrary")),
        cost_estimate=cost,
    )(tok_packed, freq_row, phase_row, tri, u_ge, u_eq)

    # Free (contiguity-preserving) reshape back to (B, S, D), drop seq padding.
    out = out_packed.reshape(bsz, seq_padded, D)
    if seq_padded != seq_len:
        out = out[:, :seq_len, :]
    return out


# ---------------------------------------------------------------------------
# Pure-JAX reference for verification
# ---------------------------------------------------------------------------
def _reference(tokens, embedding_dim, init_size, padding_idx):
    bsz, seq_len = tokens.shape
    num_emb = max(init_size, padding_idx + 1 + seq_len)
    weights = get_embedding(num_emb, embedding_dim, padding_idx)
    mask = (tokens != padding_idx).astype(jnp.int32)
    positions = jnp.cumsum(mask, axis=1) * mask + padding_idx
    return weights[positions.reshape(-1)].reshape(bsz, seq_len, -1)


if __name__ == "__main__":
    key = jax.random.PRNGKey(0)
    bsz, seq_len, embedding_dim, padding_idx = 2, 8, 32, 0

    # token ids in [0, 20); zeros act as padding tokens
    tokens = jax.random.randint(key, (bsz, seq_len), 0, 20, dtype=jnp.int32)

    out = sinusoidal_positional_embedding(
        tokens, embedding_dim=embedding_dim, init_size=1024, padding_idx=padding_idx
    )
    out = jax.block_until_ready(out)

    ref = _reference(tokens, embedding_dim, 1024, padding_idx)
    assert out.shape == (bsz, seq_len, embedding_dim)
    assert jnp.allclose(out, ref, atol=1e-4, rtol=1e-4), "mismatch vs reference"

    # Non-divisible sequence length exercises the pad-and-slice path (many pads).
    tokens2 = jax.random.randint(jax.random.PRNGKey(1), (2, 13), 0, 5, dtype=jnp.int32)
    out2 = jax.block_until_ready(
        sinusoidal_positional_embedding(tokens2, embedding_dim=32, init_size=1024,
                                        padding_idx=0))
    ref2 = _reference(tokens2, 32, 1024, 0)
    assert out2.shape == (2, 13, 32)
    assert jnp.allclose(out2, ref2, atol=1e-4, rtol=1e-4), "mismatch vs reference (padded)"

    print("KERNEL_OK")
</pallas_src>

<mosaic_0001>
module attributes {stable_mosaic.version = 11 : i64} {
  func.func @kernel(%arg0: i32, %arg1: i32, %arg2: memref<1x8x4xi32, #tpu.memory_space<vmem>>, %arg3: memref<1x128xf32, #tpu.memory_space<vmem>>, %arg4: memref<1x128xf32, #tpu.memory_space<vmem>>, %arg5: memref<8x8xf32, #tpu.memory_space<vmem>>, %arg6: memref<4x128xf32, #tpu.memory_space<vmem>>, %arg7: memref<4x128xf32, #tpu.memory_space<vmem>>, %arg8: memref<1x8x128xf32, #tpu.memory_space<vmem>>, %arg9: memref<1x1xf32, #tpu.memory_space<vmem>>) attributes {dimension_semantics = [#tpu.dimension_semantics<parallel>, #tpu.dimension_semantics<arbitrary>], iteration_bounds = array<i64: 2, 1>, scalar_prefetch = 0 : i64, scratch_operands = 1 : i64, tpu.core_type = #tpu.core_type<tc>, window_params = [{transform_indices = @transform_0, window_bounds = array<i64: 1, 8, 4>}, {pipeline_mode = #tpu.pipeline_mode<synchronous>, transform_indices = @transform_1, window_bounds = array<i64: 1, 128>}, {pipeline_mode = #tpu.pipeline_mode<synchronous>, transform_indices = @transform_2, window_bounds = array<i64: 1, 128>}, {pipeline_mode = #tpu.pipeline_mode<synchronous>, transform_indices = @transform_3, window_bounds = array<i64: 8, 8>}, {pipeline_mode = #tpu.pipeline_mode<synchronous>, transform_indices = @transform_4, window_bounds = array<i64: 4, 128>}, {pipeline_mode = #tpu.pipeline_mode<synchronous>, transform_indices = @transform_5, window_bounds = array<i64: 4, 128>}, {transform_indices = @transform_6, window_bounds = array<i64: 1, 8, 128>}]} {
    %c0_i32 = arith.constant 0 : i32
    %0 = arith.cmpi eq, %arg1, %c0_i32 : i32
    %1 = arith.extui %0 : i1 to i32
    %c0_i32_0 = arith.constant 0 : i32
    %2 = arith.cmpi ne, %1, %c0_i32_0 : i32
    scf.if %2 {
      %cst_24 = arith.constant 0.000000e+00 : f32
      %41 = vector.broadcast %cst_24 : f32 to vector<1x1xf32>
      %c0_25 = arith.constant 0 : index
      %c0_26 = arith.constant 0 : index
      %42 = vector.load %arg9[%c0_25, %c0_26] : memref<1x1xf32, #tpu.memory_space<vmem>>, vector<1x1xf32>
      tpu.vector_store %arg9[%c0_25, %c0_26], %41 {strides = array<i32>} : memref<1x1xf32, #tpu.memory_space<vmem>>, vector<1x1xf32>,
    } else {
    }
    %c0 = arith.constant 0 : index
    %c0_1 = arith.constant 0 : index
    %3 = vector.load %arg3[%c0, %c0_1] : memref<1x128xf32, #tpu.memory_space<vmem>>, vector<1x128xf32>
    %c0_2 = arith.constant 0 : index
    %c0_3 = arith.constant 0 : index
    %4 = vector.load %arg4[%c0_2, %c0_3] : memref<1x128xf32, #tpu.memory_space<vmem>>, vector<1x128xf32>
    %c0_4 = arith.constant 0 : index
    %c0_5 = arith.constant 0 : index
    %5 = vector.load %arg5[%c0_4, %c0_5] : memref<8x8xf32, #tpu.memory_space<vmem>>, vector<8x8xf32>
    %c0_6 = arith.constant 0 : index
    %c0_7 = arith.constant 0 : index
    %6 = vector.load %arg6[%c0_6, %c0_7] : memref<4x128xf32, #tpu.memory_space<vmem>>, vector<4x128xf32>
    %c0_8 = arith.constant 0 : index
    %c0_9 = arith.constant 0 : index
    %7 = vector.load %arg7[%c0_8, %c0_9] : memref<4x128xf32, #tpu.memory_space<vmem>>, vector<4x128xf32>
    %c0_10 = arith.constant 0 : index
    %c0_11 = arith.constant 0 : index
    %8 = vector.load %arg9[%c0_10, %c0_11] : memref<1x1xf32, #tpu.memory_space<vmem>>, vector<1x1xf32>
    %c0_i32_12 = arith.constant 0 : i32
    %c8_i32 = arith.constant 8 : i32
    %9 = arith.muli %c0_i32_12, %c8_i32 : i32
    %10 = tpu.assume_multiple %9, 8 : i32
    %c0_13 = arith.constant 0 : index
    %11 = arith.index_cast %10 : i32 to index
    %c0_14 = arith.constant 0 : index
    %12 = vector.load %arg2[%c0_13, %11, %c0_14] : memref<1x8x4xi32, #tpu.memory_space<vmem>>, vector<1x8x4xi32>
    %13 = vector.shape_cast %12 : vector<1x8x4xi32> to vector<8x4xi32>
    %c0_i32_15 = arith.constant 0 : i32
    %14 = vector.broadcast %c0_i32_15 : i32 to vector<8x4xi32>
    %15 = arith.cmpi ne, %13, %14 : vector<8x4xi32>
    %16 = arith.extui %15 : vector<8x4xi1> to vector<8x4xi32>
    %17 = arith.sitofp %16 : vector<8x4xi32> to vector<8x4xf32>
    %cst = arith.constant dense<0.000000e+00> : vector<8xf32>
    %18 = vector.multi_reduction <add>, %17, %cst [1] : vector<8x4xf32> to vector<8xf32>
    %19 = vector.shape_cast %18 : vector<8xf32> to vector<8x1xf32>
    %cst_16 = arith.constant dense<0.000000e+00> : vector<8x1xf32>
    %20 = tpu.matmul %5, %19, %cst_16 {dimension_numbers = #tpu.dot_dimension_numbers<[1], [0], [0], [1], [0, 0, 1, 1], [], []>} : vector<8x8xf32>, vector<8x1xf32>, vector<8x1xf32> -> vector<8x1xf32>
    %cst_17 = arith.constant dense<0.000000e+00> : vector<8x128xf32>
    %21 = tpu.matmul %17, %6, %cst_17 {dimension_numbers = #tpu.dot_dimension_numbers<[1], [0], [0], [1], [0, 0, 1, 1], [], []>} : vector<8x4xf32>, vector<4x128xf32>, vector<8x128xf32> -> vector<8x128xf32>
    %cst_18 = arith.constant dense<0.000000e+00> : vector<8x128xf32>
    %22 = tpu.matmul %17, %7, %cst_18 {dimension_numbers = #tpu.dot_dimension_numbers<[1], [0], [0], [1], [0, 0, 1, 1], [], []>} : vector<8x4xf32>, vector<4x128xf32>, vector<8x128xf32> -> vector<8x128xf32>
    %23 = vector.broadcast %8 : vector<1x1xf32> to vector<8x1xf32>
    %24 = arith.addf %23, %20 : vector<8x1xf32>
    %25 = vector.broadcast %24 : vector<8x1xf32> to vector<8x128xf32>
    %26 = arith.addf %25, %21 : vector<8x128xf32>
    %27 = vector.broadcast %3 : vector<1x128xf32> to vector<8x128xf32>
    %28 = arith.mulf %26, %27 : vector<8x128xf32>
    %29 = vector.broadcast %4 : vector<1x128xf32> to vector<8x128xf32>
    %30 = arith.addf %28, %29 : vector<8x128xf32>
    %31 = math.sin %30 : vector<8x128xf32>
    %32 = arith.mulf %31, %22 : vector<8x128xf32>
    %c0_19 = arith.constant 0 : index
    %33 = arith.index_cast %10 : i32 to index
    %c0_20 = arith.constant 0 : index
    %34 = vector.load %arg8[%c0_19, %33, %c0_20] : memref<1x8x128xf32, #tpu.memory_space<vmem>>, vector<1x8x128xf32>
    %35 = vector.shape_cast %34 : vector<1x8x128xf32> to vector<8x128xf32>
    %36 = vector.shape_cast %32 : vector<8x128xf32> to vector<1x8x128xf32>
    tpu.vector_store %arg8[%c0_19, %33, %c0_20], %36 {strides = array<i32>} : memref<1x8x128xf32, #tpu.memory_space<vmem>>, vector<1x8x128xf32>,
    %cst_21 = arith.constant dense<0.000000e+00> : vector<1xf32>
    %37 = vector.multi_reduction <add>, %19, %cst_21 [0] : vector<8x1xf32> to vector<1xf32>
    %38 = vector.shape_cast %37 : vector<1xf32> to vector<1x1xf32>
    %39 = arith.addf %8, %38 : vector<1x1xf32>
    %c1_i32 = arith.constant 1 : i32
    %c0_22 = arith.constant 0 : index
    %c0_23 = arith.constant 0 : index
    %40 = vector.load %arg9[%c0_22, %c0_23] : memref<1x1xf32, #tpu.memory_space<vmem>>, vector<1x1xf32>
    tpu.vector_store %arg9[%c0_22, %c0_23], %39 {strides = array<i32>} : memref<1x1xf32, #tpu.memory_space<vmem>>, vector<1x1xf32>,
    return
  }
  func.func @transform_0(%arg0: i32, %arg1: i32) -> (i32, i32, i32) {
    %c0_i32 = arith.constant 0 : i32
    %c0_i32_0 = arith.constant 0 : i32
    return %arg0, %arg1, %c0_i32 : i32, i32, i32
  }
  func.func @transform_1(%arg0: i32, %arg1: i32) -> (i32, i32) {
    %c0_i32 = arith.constant 0 : i32
    %c0_i32_0 = arith.constant 0 : i32
    %c0_i32_1 = arith.constant 0 : i32
    return %c0_i32, %c0_i32_0 : i32, i32
  }
  func.func @transform_2(%arg0: i32, %arg1: i32) -> (i32, i32) {
    %c0_i32 = arith.constant 0 : i32
    %c0_i32_0 = arith.constant 0 : i32
    %c0_i32_1 = arith.constant 0 : i32
    return %c0_i32, %c0_i32_0 : i32, i32
  }
  func.func @transform_3(%arg0: i32, %arg1: i32) -> (i32, i32) {
    %c0_i32 = arith.constant 0 : i32
    %c0_i32_0 = arith.constant 0 : i32
    %c0_i32_1 = arith.constant 0 : i32
    return %c0_i32, %c0_i32_0 : i32, i32
  }
  func.func @transform_4(%arg0: i32, %arg1: i32) -> (i32, i32) {
    %c0_i32 = arith.constant 0 : i32
    %c0_i32_0 = arith.constant 0 : i32
    %c0_i32_1 = arith.constant 0 : i32
    return %c0_i32, %c0_i32_0 : i32, i32
  }
  func.func @transform_5(%arg0: i32, %arg1: i32) -> (i32, i32) {
    %c0_i32 = arith.constant 0 : i32
    %c0_i32_0 = arith.constant 0 : i32
    %c0_i32_1 = arith.constant 0 : i32
    return %c0_i32, %c0_i32_0 : i32, i32
  }
  func.func @transform_6(%arg0: i32, %arg1: i32) -> (i32, i32, i32) {
    %c0_i32 = arith.constant 0 : i32
    %c0_i32_0 = arith.constant 0 : i32
    return %arg0, %arg1, %c0_i32 : i32, i32, i32
  }
}

</mosaic_0001>

<llo_original>
// kernel: tpu_custom_call.1
$region0: #{tpu_custom_call.1}
  #allocation0 [shape = 'u32[]', space=smem, size = 0x4, offset = 0x4, fixed_abs, tag = 'smem constant byte address 0x4 - core index']
  #allocation1 [shape = 'u32[144,128]{1,0:T(1,128)}', space=vmem, size = 0x12000, scoped, tag = 'internal scratch']
  #allocation2 [shape = 'f32[1,1]{1,0:T(1,128)}', space=vmem, size = 0x200, scoped, tag = 'scratch operand']
  %s0 = inlined_call_operand.vmem [shape: s32[2,8,4], index: 0, kind: input, shape index: {}]
  %s1 = inlined_call_operand.vmem [shape: f32[1,128], index: 1, kind: input, shape index: {}]
  %s2 = inlined_call_operand.vmem [shape: f32[1,128], index: 2, kind: input, shape index: {}]
  %s3 = inlined_call_operand.vmem [shape: f32[8,8], index: 3, kind: input, shape index: {}]
  %s4 = inlined_call_operand.vmem [shape: f32[4,128], index: 4, kind: input, shape index: {}]
  %s5 = inlined_call_operand.vmem [shape: f32[4,128], index: 5, kind: input, shape index: {}]
  %s6 = inlined_call_operand.hbm [shape: f32[2,8,128], index: 6, kind: output, shape index: {}]
  %s7 = sld [smem:[#allocation0]]
  $region61: #{tpu_custom_call.1} parent=0
    _
  %s9 = ssub.s32 1, %s7
  %s10 = scalar_select 0, %s9, %s7
  $region1: #{tpu_custom_call.1} parent=0
    #allocation3 [shape = 'u8[8192]{0}', space=vmem, size = 0x2000, scoped, tag = 'output window, operand 0']
    #allocation4 [shape = 's32[2]{0}', space=sflag, size = 0x8, scoped, tag = 'scoped memory for tpu_custom_call.1']
    %11 = vsyncpa [#allocation4], 0
    %s12 = scalar_lea.sflag [#allocation4], 1
    %13 = vsyncpa %s12, 0
    loop: start=0, step=1, limit=4
    $region2: #{tpu_custom_call.1} parent=1 // loop_pre_header
      _
    $region3: #{tpu_custom_call.1} parent=1 // loop_header
      %s15 = sphi 0, %s19
      %p16 = scmp.ge.s32.totalorder %s15, 4
      %s22 = sphi 0, %s34
      %s23 = sphi 0, %s30
      %s24 = sphi 0, %s22
      %s25 = sphi 0, %s23
      %s26 = sphi 0, %s24
      %s27 = sphi 0, %s25
      %s39 = sphi 0, %s41
      %s42 = sphi 0, %s39
      %s43 = sphi 0, %s42
      %s59 = sphi 0, %s43
      %s63 = sphi 0, %s63
      %s65 = sphi 0, %s63
      %s66 = sphi 0, %s65
      %s80 = sphi 0, %s66
      %s84 = sphi 0, %s84
      %s86 = sphi 0, %s84
      %s87 = sphi 0, %s86
      %s101 = sphi 0, %s87
      %s105 = sphi 0, %s105
      %s107 = sphi 0, %s105
      %s108 = sphi 0, %s107
      %s122 = sphi 0, %s108
      %s126 = sphi 0, %s126
      %s128 = sphi 0, %s126
      %s129 = sphi 0, %s128
      %s143 = sphi 0, %s129
      %s147 = sphi 0, %s147
      %s149 = sphi 0, %s147
      %s150 = sphi 0, %s149
      %s164 = sphi 0, %s150
      %s172 = sphi 0, %s174
      %s175 = sphi 0, %s172
      %s176 = sphi 0, %s175
      %s192 = sphi 0, %s176
    $region4: #{tpu_custom_call.1} parent=1 // loop_header_branch
      %18 = sbr.rel (%p16) target = $region8
    $region5: #{tpu_custom_call.1} parent=1 // loop_body
      %s20 = ssub.s32 %s15, 1
      %s21 = ssub.s32 %s15, 2
      %s28 = sadd.s32 1, %s23
      %p29 = scmp.ge.s32.totalorder %s28, 1
      %s30 = scalar_select %p29, 0, %s28
      %s31 = sadd.s32 1, %s22
      %s32 = scalar_select %p29, %s31, %s22
      %p33 = scmp.ge.s32.totalorder %s32, 2
      %s34 = scalar_select %p33, 0, %s32
      %s35 = ssub.s32 %s22, %s34
      %s36 = ssub.s32 %s23, %s30
      %s37 = sor.u32 %s35, %s36
      %p38 = scmp.eq.s32.totalorder %s37, 0
      %s40 = sadd.s32 %s39, 1
      %s41 = scalar_select %p38, %s39, %s40
      %p44 = pneg %p38
      %p45 = scmp.eq.s32.totalorder %s15, 1
      %p46 = por %p44, %p45
      %p47 = scmp.ne.s32.totalorder %s39, %s42
      %p48 = scmp.eq.s32.totalorder %s15, 0
      %p49 = por %p47, %p48
      %p50 = scmp.ne.s32.totalorder %s39, %s42
      %p51 = scmp.eq.s32.totalorder %s20, 1
      %p52 = por %p50, %p51
      %p53 = scmp.ne.s32.totalorder %s42, %s43
      %p54 = scmp.eq.s32.totalorder %s20, 0
      %p55 = por %p53, %p54
      %p56 = scmp.ne.s32.totalorder %s42, %s43
      %p57 = scmp.eq.s32.totalorder %s21, 1
      %p58 = por %p56, %p57
      %p60 = scmp.ne.s32.totalorder %s43, %s59
      %p61 = scmp.eq.s32.totalorder %s21, 0
      %p62 = por %p60, %p61
      %s64 = sadd.s32 %s63, 1
      %p67 = scmp.eq.s32.totalorder %s15, 1
      %p68 = scmp.ne.s32.totalorder %s63, %s65
      %p69 = scmp.eq.s32.totalorder %s15, 0
      %p70 = por %p68, %p69
      %p71 = scmp.ne.s32.totalorder %s63, %s65
      %p72 = scmp.eq.s32.totalorder %s20, 1
      %p73 = por %p71, %p72
      %p74 = scmp.ne.s32.totalorder %s65, %s66
      %p75 = scmp.eq.s32.totalorder %s20, 0
      %p76 = por %p74, %p75
      %p77 = scmp.ne.s32.totalorder %s65, %s66
      %p78 = scmp.eq.s32.totalorder %s21, 1
      %p79 = por %p77, %p78
      %p81 = scmp.ne.s32.totalorder %s66, %s80
      %p82 = scmp.eq.s32.totalorder %s21, 0
      %p83 = por %p81, %p82
      %s85 = sadd.s32 %s84, 1
      %p88 = scmp.eq.s32.totalorder %s15, 1
      %p89 = scmp.ne.s32.totalorder %s84, %s86
      %p90 = scmp.eq.s32.totalorder %s15, 0
      %p91 = por %p89, %p90
      %p92 = scmp.ne.s32.totalorder %s84, %s86
      %p93 = scmp.eq.s32.totalorder %s20, 1
      %p94 = por %p92, %p93
      %p95 = scmp.ne.s32.totalorder %s86, %s87
      %p96 = scmp.eq.s32.totalorder %s20, 0
      %p97 = por %p95, %p96
      %p98 = scmp.ne.s32.totalorder %s86, %s87
      %p99 = scmp.eq.s32.totalorder %s21, 1
      %p100 = por %p98, %p99
      %p102 = scmp.ne.s32.totalorder %s87, %s101
      %p103 = scmp.eq.s32.totalorder %s21, 0
      %p104 = por %p102, %p103
      %s106 = sadd.s32 %s105, 1
      %p109 = scmp.eq.s32.totalorder %s15, 1
      %p110 = scmp.ne.s32.totalorder %s105, %s107
      %p111 = scmp.eq.s32.totalorder %s15, 0
      %p112 = por %p110, %p111
      %p113 = scmp.ne.s32.totalorder %s105, %s107
      %p114 = scmp.eq.s32.totalorder %s20, 1
      %p115 = por %p113, %p114
      %p116 = scmp.ne.s32.totalorder %s107, %s108
      %p117 = scmp.eq.s32.totalorder %s20, 0
      %p118 = por %p116, %p117
      %p119 = scmp.ne.s32.totalorder %s107, %s108
      %p120 = scmp.eq.s32.totalorder %s21, 1
      %p121 = por %p119, %p120
      %p123 = scmp.ne.s32.totalorder %s108, %s122
      %p124 = scmp.eq.s32.totalorder %s21, 0
      %p125 = por %p123, %p124
      %s127 = sadd.s32 %s126, 1
      %p130 = scmp.eq.s32.totalorder %s15, 1
      %p131 = scmp.ne.s32.totalorder %s126, %s128
      %p132 = scmp.eq.s32.totalorder %s15, 0
      %p133 = por %p131, %p132
      %p134 = scmp.ne.s32.totalorder %s126, %s128
      %p135 = scmp.eq.s32.totalorder %s20, 1
      %p136 = por %p134, %p135
      %p137 = scmp.ne.s32.totalorder %s128, %s129
      %p138 = scmp.eq.s32.totalorder %s20, 0
      %p139 = por %p137, %p138
      %p140 = scmp.ne.s32.totalorder %s128, %s129
      %p141 = scmp.eq.s32.totalorder %s21, 1
      %p142 = por %p140, %p141
      %p144 = scmp.ne.s32.totalorder %s129, %s143
      %p145 = scmp.eq.s32.totalorder %s21, 0
      %p146 = por %p144, %p145
      %s148 = sadd.s32 %s147, 1
      %p151 = scmp.eq.s32.totalorder %s15, 1
      %p152 = scmp.ne.s32.totalorder %s147, %s149
      %p153 = scmp.eq.s32.totalorder %s15, 0
      %p154 = por %p152, %p153
      %p155 = scmp.ne.s32.totalorder %s147, %s149
      %p156 = scmp.eq.s32.totalorder %s20, 1
      %p157 = por %p155, %p156
      %p158 = scmp.ne.s32.totalorder %s149, %s150
      %p159 = scmp.eq.s32.totalorder %s20, 0
      %p160 = por %p158, %p159
      %p161 = scmp.ne.s32.totalorder %s149, %s150
      %p162 = scmp.eq.s32.totalorder %s21, 1
      %p163 = por %p161, %p162
      %p165 = scmp.ne.s32.totalorder %s150, %s164
      %p166 = scmp.eq.s32.totalorder %s21, 0
      %p167 = por %p165, %p166
      %s168 = ssub.s32 %s22, %s34
      %s169 = ssub.s32 %s23, %s30
      %s170 = sor.u32 %s168, %s169
      %p171 = scmp.eq.s32.totalorder %s170, 0
      %s173 = sadd.s32 %s172, 1
      %s174 = scalar_select %p171, %s172, %s173
      %p177 = pneg %p171
      %p178 = scmp.eq.s32.totalorder %s15, 1
      %p179 = por %p177, %p178
      %p180 = scmp.ne.s32.totalorder %s172, %s175
      %p181 = scmp.eq.s32.totalorder %s15, 0
      %p182 = por %p180, %p181
      %p183 = scmp.ne.s32.totalorder %s172, %s175
      %p184 = scmp.eq.s32.totalorder %s20, 1
      %p185 = por %p183, %p184
      %p186 = scmp.ne.s32.totalorder %s175, %s176
      %p187 = scmp.eq.s32.totalorder %s20, 0
      %p188 = por %p186, %p187
      %p189 = scmp.ne.s32.totalorder %s175, %s176
      %p190 = scmp.eq.s32.totalorder %s21, 1
      %p191 = por %p189, %p190
      %p193 = scmp.ne.s32.totalorder %s176, %s192
      %p194 = scmp.eq.s32.totalorder %s21, 0
      %p195 = por %p193, %p194
      %p196 = scmp.le.s32.totalorder 1, %s15
      %p197 = scmp.lt.s32.totalorder %s15, 3
      %p198 = pnand %p196, %p197
      %p199 = pneg %p198
      // Predicated region
      $region9: #{tpu_custom_call.1} parent=5 // pred_check
        _
      $region10: #{tpu_custom_call.1} parent=5 // pred_check_branch
        %201 = sbr.rel (%p198) target = $region12
      $region11: #{tpu_custom_call.1} parent=5 // pred_region
        %s202 = ssub.s32 %s15, 1
        // Predicated region
        $region13: #{tpu_custom_call.1} parent=11 // pred_check
          %p203 = pneg %p76
        $region14: #{tpu_custom_call.1} parent=11 // pred_check_branch
          %205 = sbr.rel (%p203) target = $region16
        $region15: #{tpu_custom_call.1} parent=11 // pred_region
          _
        $region16: #{tpu_custom_call.1} parent=11 // pred_fallthru
          _
        // Predicated region
        $region17: #{tpu_custom_call.1} parent=11 // pred_check
          %p206 = pneg %p97
        $region18: #{tpu_custom_call.1} parent=11 // pred_check_branch
          %208 = sbr.rel (%p206) target = $region20
        $region19: #{tpu_custom_call.1} parent=11 // pred_region
          _
        $region20: #{tpu_custom_call.1} parent=11 // pred_fallthru
          _
        // Predicated region
        $region21: #{tpu_custom_call.1} parent=11 // pred_check
          %p209 = pneg %p118
        $region22: #{tpu_custom_call.1} parent=11 // pred_check_branch
          %211 = sbr.rel (%p209) target = $region24
        $region23: #{tpu_custom_call.1} parent=11 // pred_region
          _
        $region24: #{tpu_custom_call.1} parent=11 // pred_fallthru
          _
        // Predicated region
        $region25: #{tpu_custom_call.1} parent=11 // pred_check
          %p212 = pneg %p139
        $region26: #{tpu_custom_call.1} parent=11 // pred_check_branch
          %214 = sbr.rel (%p212) target = $region28
        $region27: #{tpu_custom_call.1} parent=11 // pred_region
          _
        $region28: #{tpu_custom_call.1} parent=11 // pred_fallthru
          _
        // Predicated region
        $region29: #{tpu_custom_call.1} parent=11 // pred_check
          %p215 = pneg %p160
        $region30: #{tpu_custom_call.1} parent=11 // pred_check_branch
          %217 = sbr.rel (%p215) target = $region32
        $region31: #{tpu_custom_call.1} parent=11 // pred_region
          _
        $region32: #{tpu_custom_call.1} parent=11 // pred_fallthru
          _
      $region12: #{tpu_custom_call.1} parent=5 // pred_fallthru
        _
      %p218 = scmp.lt.s32.totalorder %s15, 2
      // Predicated region
      $region33: #{tpu_custom_call.1} parent=5 // pred_check
        %p219 = pneg %p218
      $region34: #{tpu_custom_call.1} parent=5 // pred_check_branch
        %221 = sbr.rel (%p219) target = $region36
      $region35: #{tpu_custom_call.1} parent=5 // pred_region
        // Predicated region
        $region37: #{tpu_custom_call.1} parent=35 // pred_check
          %p222 = pneg %p49
        $region38: #{tpu_custom_call.1} parent=35 // pred_check_branch
          %224 = sbr.rel (%p222) target = $region40
        $region39: #{tpu_custom_call.1} parent=35 // pred_region
          %p225 = scmp.lt.s32.totalorder %s22, 1
          %s226 = scalar_select %p225, %s22, 1
          %p227 = scmp.lt.s32.totalorder %s23, 0
          %s228 = scalar_select %p227, %s23, 0
          %s229 = sadd.s32 %s228, %s226
          %s230 = smul.addr %s229, 8
          %s231 = scalar_lea.vmem %s0, %s230
        $region40: #{tpu_custom_call.1} parent=35 // pred_fallthru
          _
      $region36: #{tpu_custom_call.1} parent=5 // pred_fallthru
        _
      %p232 = scmp.le.s32.totalorder 1, %s15
      %p233 = scmp.lt.s32.totalorder %s15, 3
      %p234 = pnand %p232, %p233
      %p235 = pneg %p234
      // Predicated region
      $region41: #{tpu_custom_call.1} parent=5 // pred_check
        _
      $region42: #{tpu_custom_call.1} parent=5 // pred_check_branch
        %237 = sbr.rel (%p234) target = $region44
      $region43: #{tpu_custom_call.1} parent=5 // pred_region
        %s238 = ssub.s32 %s15, 1
        %p239 = scmp.lt.s32.totalorder %s24, 1
        %s240 = scalar_select %p239, %s24, 1
        %p241 = scmp.lt.s32.totalorder %s25, 0
        %s242 = scalar_select %p241, %s25, 0
        %s243 = sadd.s32 %s242, %s240
        %s244 = smul.addr %s243, 8
        %s245 = scalar_lea.vmem %s0, %s244
        %p246 = pneg %p55
        %p247 = pneg %p52
        %p248 = pneg %p76
        %p249 = pneg %p73
        %p250 = pneg %p97
        %p251 = pneg %p94
        %p252 = pneg %p118
        %p253 = pneg %p115
        %p254 = pneg %p139
        %p255 = pneg %p136
        %p256 = pneg %p160
        %p257 = pneg %p157
        %p258 = pneg %p188
        %p259 = pneg %p185
        %s260 = sand.u32 %s175, 1
        %s261 = scalar_lea.sflag [#allocation4], %s260
        %s262 = sand.u32 %s175, 1
        %s263 = smul.addr %s262, 8
        %s264 = scalar_lea.vmem [#allocation3], %s263
        %p265 = scmp.lt.s32.totalorder %s24, 1
        %s266 = scalar_select %p265, %s24, 1
        %p267 = scmp.lt.s32.totalorder %s25, 0
        %s268 = scalar_select %p267, %s25, 0
        %s269 = sadd.s32 %s268, %s266
        %s270 = smul.addr %s269, 8
        %s271 = scalar_lea.vmem %s0, %s270
        %p272 = scmp.eq.s32.totalorder %s25, 0
        // Predicated region
        $region45: #{tpu_custom_call.1} parent=43 // pred_check
          %p273 = pneg %p272
        $region46: #{tpu_custom_call.1} parent=43 // pred_check_branch
          %275 = sbr.rel (%p273) target = $region48
        $region47: #{tpu_custom_call.1} parent=43 // pred_region
          %vm276 = vcmask 0
          %277 = vst.msk [vmem:[#allocation2] sm:$0x1] %vm276, 0.0
        $region48: #{tpu_custom_call.1} parent=43 // pred_fallthru
          _
        %v278 = vld [vmem:[%s1] sm:$0x1]
        %v279 = vld [vmem:[%s2] sm:$0x1]
        %v280 = vld [vmem:[%s3] sm:$0xff]
        %v281 = vld [vmem:[%s4] sm:$0xf]
        %v282 = vld [vmem:[%s5] sm:$0xf]
        %v283 = vld [vmem:[#allocation2] sm:$0x1]
        %v284 = vld [vmem:[%s271] sm:$0xff]
        %vm285 = vcmp.ne.s32.totalorder %v284, 0
        %v286 = vsel %vm285, 1, 0
        %v287 = vcvt.s32.f32 %v286
        %vm288 = vcmask 31744
        %v289 = vsel %vm288, %v287, 0.0
        %290 = vadd.xlane.f32.xlu0 %v289
        %v291 = vpop.xlane.xlu0 %290
        %vm292 = vcmask 64512
        %v294 = vsel %vm292, %v280, 0
        %296 = vmatprep.subr.mxu0 0.0
        %297 = vmatpush1.msra.mxu0 %v291
        %298 = vmatprep.subr.mxu0 0.0
        %299 = vmatpush1.msra.mxu0 0.0
        %300 = vmatprep.subr.mxu0 0.0
        %301 = vmatpush1.msra.mxu0 0.0
        %302 = vmatprep.subr.mxu0 0.0
        %303 = vmatpush1.msra.mxu0 0.0
        %304 = vmatprep.subr.mxu0 0.0
        %305 = vmatpush1.msra.mxu0 0.0
        %306 = vmatprep.subr.mxu0 0.0
        %307 = vmatpush1.msra.mxu0 0.0
        %308 = vmatprep.subr.mxu0 0.0
        %309 = vmatpush1.msra.mxu0 0.0
        %310 = vmatprep.subr.mxu0 0.0
        %311 = vmatpush1.msra.mxu0 0.0
        %312 = vmatprep.subr.mxu0 0.0
        %313 = vmatpush1.msra.mxu0 0.0
        %314 = vmatprep.subr.mxu0 0.0
        %315 = vmatpush1.msra.mxu0 0.0
        %316 = vmatprep.subr.mxu0 0.0
        %317 = vmatpush1.msra.mxu0 0.0
        %318 = vmatprep.subr.mxu0 0.0
        %319 = vmatpush1.msra.mxu0 0.0
        %320 = vmatprep.subr.mxu0 0.0
        %321 = vmatpush1.msra.mxu0 0.0
        %322 = vmatprep.subr.mxu0 0.0
        %323 = vmatpush1.msra.mxu0 0.0
        %324 = vmatprep.subr.mxu0 0.0
        %325 = vmatpush1.msra.mxu0 0.0
        %326 = vmatprep.subr.mxu0 0.0
        %327 = vmatpush1.msra.mxu0 0.0
        %328 = vmatprep.subr.mxu0 0.0
        %329 = vmatpush1.msra.mxu0 0.0
        %330 = vmatprep.subr.mxu0 0.0
        %331 = vmatpush1.msra.mxu0 0.0
        %332 = vmatprep.subr.mxu0 0.0
        %333 = vmatpush1.msra.mxu0 0.0
        %334 = vmatprep.subr.mxu0 0.0
        %335 = vmatpush1.msra.mxu0 0.0
        %336 = vmatprep.subr.mxu0 0.0
        %337 = vmatpush1.msra.mxu0 0.0
        %338 = vmatprep.subr.mxu0 0.0
        %339 = vmatpush1.msra.mxu0 0.0
        %340 = vmatprep.subr.mxu0 0.0
        %341 = vmatpush1.msra.mxu0 0.0
        %342 = vmatprep.subr.mxu0 0.0
        %343 = vmatpush1.msra.mxu0 0.0
        %344 = vmatprep.subr.mxu0 0.0
        %345 = vmatpush1.msra.mxu0 0.0
        %346 = vmatprep.subr.mxu0 0.0
        %347 = vmatpush1.msra.mxu0 0.0
        %348 = vmatprep.subr.mxu0 0.0
        %349 = vmatpush1.msra.mxu0 0.0
        %350 = vmatprep.subr.mxu0 0.0
        %351 = vmatpush1.msra.mxu0 0.0
        %352 = vmatprep.subr.mxu0 0.0
        %353 = vmatpush1.msra.mxu0 0.0
        %354 = vmatprep.subr.mxu0 0.0
        %355 = vmatpush1.msra.mxu0 0.0
        %356 = vmatprep.subr.mxu0 0.0
        %357 = vmatpush1.msra.mxu0 0.0
        %358 = vmatprep.subr.mxu0 0.0
        %359 = vmatpush1.msra.mxu0 0.0
        %360 = vmatprep.mubr.f32.mxu0 0.0
        %361 = vmatmul.mubr.f32.gmra.mrb[0].mxu0 %v294
        %v362 = vpop.f32.mrb[0].mxu0
        %v363 = vadd.f32 0.0, %v362
        %v364 = vpop.f32.mrb[0].mxu0
        %365 = vdwg.mxu0
        %v367 = vsel %vm288, %v287, 0
        %vm369 = vcmask 1043456
        %v371 = vsel %vm369, %v281, 0
        %373 = vmatprep.subr.mxu0 0.0
        %374 = vmatpush1.msra.mxu0 %v371
        %375 = vmatprep.subr.mxu0 0.0
        %376 = vmatpush1.msra.mxu0 0.0
        %377 = vmatprep.subr.mxu0 0.0
        %378 = vmatpush1.msra.mxu0 0.0
        %379 = vmatprep.subr.mxu0 0.0
        %380 = vmatpush1.msra.mxu0 0.0
        %381 = vmatprep.subr.mxu0 0.0
        %382 = vmatpush1.msra.mxu0 0.0
        %383 = vmatprep.subr.mxu0 0.0
        %384 = vmatpush1.msra.mxu0 0.0
        %385 = vmatprep.subr.mxu0 0.0
        %386 = vmatpush1.msra.mxu0 0.0
        %387 = vmatprep.subr.mxu0 0.0
        %388 = vmatpush1.msra.mxu0 0.0
        %389 = vmatprep.subr.mxu0 0.0
        %390 = vmatpush1.msra.mxu0 0.0
        %391 = vmatprep.subr.mxu0 0.0
        %392 = vmatpush1.msra.mxu0 0.0
        %393 = vmatprep.subr.mxu0 0.0
        %394 = vmatpush1.msra.mxu0 0.0
        %395 = vmatprep.subr.mxu0 0.0
        %396 = vmatpush1.msra.mxu0 0.0
        %397 = vmatprep.subr.mxu0 0.0
        %398 = vmatpush1.msra.mxu0 0.0
        %399 = vmatprep.subr.mxu0 0.0
        %400 = vmatpush1.msra.mxu0 0.0
        %401 = vmatprep.subr.mxu0 0.0
        %402 = vmatpush1.msra.mxu0 0.0
        %403 = vmatprep.subr.mxu0 0.0
        %404 = vmatpush1.msra.mxu0 0.0
        %405 = vmatprep.subr.mxu0 0.0
        %406 = vmatpush1.msra.mxu0 0.0
        %407 = vmatprep.subr.mxu0 0.0
        %408 = vmatpush1.msra.mxu0 0.0
        %409 = vmatprep.subr.mxu0 0.0
        %410 = vmatpush1.msra.mxu0 0.0
        %411 = vmatprep.subr.mxu0 0.0
        %412 = vmatpush1.msra.mxu0 0.0
        %413 = vmatprep.subr.mxu0 0.0
        %414 = vmatpush1.msra.mxu0 0.0
        %415 = vmatprep.subr.mxu0 0.0
        %416 = vmatpush1.msra.mxu0 0.0
        %417 = vmatprep.subr.mxu0 0.0
        %418 = vmatpush1.msra.mxu0 0.0
        %419 = vmatprep.subr.mxu0 0.0
        %420 = vmatpush1.msra.mxu0 0.0
        %421 = vmatprep.subr.mxu0 0.0
        %422 = vmatpush1.msra.mxu0 0.0
        %423 = vmatprep.subr.mxu0 0.0
        %424 = vmatpush1.msra.mxu0 0.0
        %425 = vmatprep.subr.mxu0 0.0
        %426 = vmatpush1.msra.mxu0 0.0
        %427 = vmatprep.subr.mxu0 0.0
        %428 = vmatpush1.msra.mxu0 0.0
        %429 = vmatprep.subr.mxu0 0.0
        %430 = vmatpush1.msra.mxu0 0.0
        %431 = vmatprep.subr.mxu0 0.0
        %432 = vmatpush1.msra.mxu0 0.0
        %433 = vmatprep.subr.mxu0 0.0
        %434 = vmatpush1.msra.mxu0 0.0
        %435 = vmatprep.subr.mxu0 0.0
        %436 = vmatpush1.msra.mxu0 0.0
        %437 = vmatprep.mubr.f32.mxu0 0.0
        %438 = vmatmul.mubr.f32.gmra.mrb[0].mxu0 %v367
        %v439 = vpop.f32.mrb[0].mxu0
        %v440 = vadd.f32 0.0, %v439
        %v441 = vpop.f32.mrb[0].mxu0
        %442 = vdwg.mxu0
        %v444 = vsel %vm369, %v282, 0
        %446 = vmatprep.subr.mxu0 0.0
        %447 = vmatpush1.msra.mxu0 %v444
        %448 = vmatprep.subr.mxu0 0.0
        %449 = vmatpush1.msra.mxu0 0.0
        %450 = vmatprep.subr.mxu0 0.0
        %451 = vmatpush1.msra.mxu0 0.0
        %452 = vmatprep.subr.mxu0 0.0
        %453 = vmatpush1.msra.mxu0 0.0
        %454 = vmatprep.subr.mxu0 0.0
        %455 = vmatpush1.msra.mxu0 0.0
        %456 = vmatprep.subr.mxu0 0.0
        %457 = vmatpush1.msra.mxu0 0.0
        %458 = vmatprep.subr.mxu0 0.0
        %459 = vmatpush1.msra.mxu0 0.0
        %460 = vmatprep.subr.mxu0 0.0
        %461 = vmatpush1.msra.mxu0 0.0
        %462 = vmatprep.subr.mxu0 0.0
        %463 = vmatpush1.msra.mxu0 0.0
        %464 = vmatprep.subr.mxu0 0.0
        %465 = vmatpush1.msra.mxu0 0.0
        %466 = vmatprep.subr.mxu0 0.0
        %467 = vmatpush1.msra.mxu0 0.0
        %468 = vmatprep.subr.mxu0 0.0
        %469 = vmatpush1.msra.mxu0 0.0
        %470 = vmatprep.subr.mxu0 0.0
        %471 = vmatpush1.msra.mxu0 0.0
        %472 = vmatprep.subr.mxu0 0.0
        %473 = vmatpush1.msra.mxu0 0.0
        %474 = vmatprep.subr.mxu0 0.0
        %475 = vmatpush1.msra.mxu0 0.0
        %476 = vmatprep.subr.mxu0 0.0
        %477 = vmatpush1.msra.mxu0 0.0
        %478 = vmatprep.subr.mxu0 0.0
        %479 = vmatpush1.msra.mxu0 0.0
        %480 = vmatprep.subr.mxu0 0.0
        %481 = vmatpush1.msra.mxu0 0.0
        %482 = vmatprep.subr.mxu0 0.0
        %483 = vmatpush1.msra.mxu0 0.0
        %484 = vmatprep.subr.mxu0 0.0
        %485 = vmatpush1.msra.mxu0 0.0
        %486 = vmatprep.subr.mxu0 0.0
        %487 = vmatpush1.msra.mxu0 0.0
        %488 = vmatprep.subr.mxu0 0.0
        %489 = vmatpush1.msra.mxu0 0.0
        %490 = vmatprep.subr.mxu0 0.0
        %491 = vmatpush1.msra.mxu0 0.0
        %492 = vmatprep.subr.mxu0 0.0
        %493 = vmatpush1.msra.mxu0 0.0
        %494 = vmatprep.subr.mxu0 0.0
        %495 = vmatpush1.msra.mxu0 0.0
        %496 = vmatprep.subr.mxu0 0.0
        %497 = vmatpush1.msra.mxu0 0.0
        %498 = vmatprep.subr.mxu0 0.0
        %499 = vmatpush1.msra.mxu0 0.0
        %500 = vmatprep.subr.mxu0 0.0
        %501 = vmatpush1.msra.mxu0 0.0
        %502 = vmatprep.subr.mxu0 0.0
        %503 = vmatpush1.msra.mxu0 0.0
        %504 = vmatprep.subr.mxu0 0.0
        %505 = vmatpush1.msra.mxu0 0.0
        %506 = vmatprep.subr.mxu0 0.0
        %507 = vmatpush1.msra.mxu0 0.0
        %508 = vmatprep.subr.mxu0 0.0
        %509 = vmatpush1.msra.mxu0 0.0
        %510 = vmatprep.mubr.f32.mxu0 0.0
        %511 = vmatmul.mubr.f32.gmra.mrb[0].mxu0 %v367
        %v512 = vpop.f32.mrb[0].mxu0
        %v513 = vadd.f32 0.0, %v512
        %v514 = vpop.f32.mrb[0].mxu0
        %515 = vdwg.mxu0
        %v517 = vlaneseq
        %v518 = vshrl.u32 %v517, 7
        %v519 = vsub.s32 0, %v518
        %v520 = vrot.slane %v283, %v519
        %v522 = vadd.f32 %v520, %v363
        %524 = vset.pattern.permute.xlu0 0
        %525 = vperm.xlu0 %524, %v522
        %v526 = vpop.permute.xlu0 %525
        %v528 = vadd.f32 %v526, %v440
        %v530 = vlaneseq
        %v531 = vshrl.u32 %v530, 7
        %v532 = vsub.s32 0, %v531
        %v533 = vrot.slane %v278, %v532
        %v535 = vmul.f32 %v528, %v533
        %v537 = vlaneseq
        %v538 = vshrl.u32 %v537, 7
        %v539 = vsub.s32 0, %v538
        %v540 = vrot.slane %v279, %v539
        %v542 = vadd.f32 %v535, %v540
        %v543 = vand.u32 2147483647, %v542
        %vm544 = vcmp.le.f32.partialorder %v543, 0.7853982
        %vm545 = vcmp.lt.s32.totalorder %v542, 0
        %v546 = vand.u32 %v542, 2139095040
        %v547 = vshrl.u32 %v546, 23
        %v548 = vsub.s32 %v547, 127
        %v549 = vand.u32 2147483647, %v542
        %v550 = vand.u32 %v549, 8388607
        %v551 = vor.u32 %v550, 8388608
        %v552 = vsub.s32 0, %v551
        %v553 = vadd.s32 %v548, 1
        %vm554 = vcmp.gt.s32.totalorder %v553, 0
        %v555 = vsel %vm554, %v553, 0
        %v556 = vshrl.u32 %v555, 5
        %v557 = vand.u32 %v555, 31
        %v558 = vsub.s32 32, %v557
        %v559 = vshrl.u32 683565275, %v558
        %v560 = vshll.u32 683565275, %v557
        %v561 = vshrl.u32 2475754826, %v558
        %v562 = vor.u32 %v560, %v561
        %v563 = vshll.u32 2475754826, %v557
        %v564 = vshrl.u32 2131351028, %v558
        %v565 = vor.u32 %v563, %v564
        %v566 = vshll.u32 2131351028, %v557
        %v567 = vshrl.u32 2102212464, %v558
        %v568 = vor.u32 %v566, %v567
        %v569 = vshll.u32 2102212464, %v557
        %v570 = vshrl.u32 920167782, %v558
        %v571 = vor.u32 %v569, %v570
        %v572 = vshll.u32 920167782, %v557
        %v573 = vshrl.u32 1326507024, %v558
        %v574 = vor.u32 %v572, %v573
        %vm575 = vcmp.lt.s32.totalorder %v556, 1
        %vm576 = vcmp.lt.s32.totalorder %v556, 2
        %vm577 = vcmp.lt.s32.totalorder %v556, 3
        %vm578 = vcmp.lt.s32.totalorder %v556, 4
        %v579 = vsel %vm575, %v559, %v562
        %v580 = vsel %vm578, %v568, 2102212464
        %v581 = vsel %vm577, %v565, %v580
        %v582 = vsel %vm576, %v579, %v581
        %v583 = vsel %vm575, %v562, %v565
        %v584 = vsel %vm578, %v571, 920167782
        %v585 = vsel %vm577, %v568, %v584
        %v586 = vsel %vm576, %v583, %v585
        %v587 = vsel %vm575, %v565, %v568
        %v588 = vsel %vm578, %v574, 1326507024
        %v589 = vsel %vm577, %v571, %v588
        %v590 = vsel %vm576, %v587, %v589
        %v591 = vshll.u32 %v551, 8
        %v592 = vmul.u32.u64.compose %v591, %v590
        %v593 = vextract.low.u32 %v592
        %v594 = vextract.high.u32 %v592
        %v595 = vmul.u32.u64.compose %v591, %v586
        %v596 = vextract.low.u32 %v595
        %v597 = vextract.high.u32 %v595
        %v598 = vmul.u32 %v591, %v582
        %v599 = vadd.s32 %v594, %v596
        %vm600 = vc.u32 %v594, %v596
        %v601 = vadd.s32 %v597, 1
        %v602 = vsel %vm600, %v601, %v597
        %v603 = vadd.s32 %v598, %v602
        %v604 = vadd.s32 %v603, 536870912
        %v605 = vshrl.u32 %v604, 30
        %v606 = vshll.u32 %v605, 30
        %v607 = vsub.s32 %v603, %v606
        %vm608 = vcmp.lt.s32.totalorder %v607, 0
        %v609 = vsub.s32 0, %v607
        %v610 = vsel %vm608, %v609, %v607
        %v611 = vclz %v610
        %v612 = vsub.s32 %v611, 2
        %vm613 = vcmp.gt.s32.totalorder 0, %v612
        %v614 = vsel %vm613, 0, %v612
        %v615 = vsub.s32 32, %v614
        %v616 = vshll.u32 %v607, %v614
        %v617 = vshrl.u32 %v599, %v615
        %v618 = vor.u32 %v616, %v617
        %v619 = vsub.s32 4294967266, %v614
        %v620 = vadd.s32 %v619, 127
        %v621 = vshll.u32 %v620, 23
        %v622 = vor.u32 4788187, %v621
        %v623 = vand.u32 2147483647, %v622
        %v625 = vcvt.s32.f32 %v618
        %v626 = vmul.f32 %v625, %v623
        %v627 = vxor.u32 %v626, 2147483648
        %v628 = vsel %vm545, %v627, %v626
        %v629 = vsub.s32 4, %v605
        %v630 = vsel %vm545, %v629, %v605
        %v631 = vsel %vm544, %v542, %v628
        %v632 = vsel %vm544, 0, %v630
        %v633 = vcosq.f32.pop %v631
        %v634 = vsinq.f32.pop %v631
        %vm635 = vweird.f32 %v542
        %v636 = vadd.s32 %v632, 3
        %v637 = vand.u32 %v636, 3
        %vm638 = vcmp.lt.s32.totalorder %v637, 2
        %vm639 = vcmp.eq.s32.totalorder %v637, 0
        %v640 = vxor.u32 %v634, 2147483648
        %v641 = vsel %vm639, %v633, %v640
        %vm642 = vcmp.eq.s32.totalorder %v637, 2
        %v643 = vxor.u32 %v633, 2147483648
        %v644 = vsel %vm642, %v643, %v634
        %v645 = vsel %vm638, %v641, %v644
        %v646 = vsel %vm635, nan, %v645
        %v647 = vmul.f32 %v646, %v513
        %648 = vst [vmem:[%s264] sm:$0xff] %v647
        %v649 = vrot.slane %v291, 4
        %v650 = vadd.f32 %v291, %v649
        %v651 = vrot.slane %v650, 2
        %v652 = vadd.f32 %v650, %v651
        %v653 = vrot.slane %v652, 1
        %v654 = vadd.f32 %v652, %v653
        %v655 = vadd.f32 %v283, %v654
        %vm656 = vcmask 0
        %657 = vst.msk [vmem:[#allocation2] sm:$0x1] %vm656, %v655
        %s658 = sand.u32 %s175, 1
        %s659 = scalar_lea.sflag [#allocation4], %s658
        %s660 = sand.u32 %s175, 1
        %s661 = smul.addr %s660, 8
        %s662 = scalar_lea.vmem [#allocation3], %s661
        // Predicated region
        $region49: #{tpu_custom_call.1} parent=43 // pred_check
          %p663 = pneg %p185
        $region50: #{tpu_custom_call.1} parent=43 // pred_check_branch
          %665 = sbr.rel (%p663) target = $region52
        $region51: #{tpu_custom_call.1} parent=43 // pred_region
          %s667 = ssub.s32 128, 128
          %668 = vsyncadd %s659, %s667
          %s669 = sadd.s32 %s25, %s24
          %s670 = smul.addr %s669, 128
          %s671 = scalar_lea.hbm %s6, %s670
          %s673 = sshll.u32 %s662, 4
          %s674 = int_to_ptr.vmem [resolvable:$true] %s673
          %676 = dma.vmem_to_hbm [thread:$0]  %s674, 128, %s671, %s659
        $region52: #{tpu_custom_call.1} parent=43 // pred_fallthru
          _
      $region44: #{tpu_custom_call.1} parent=5 // pred_fallthru
        _
      %p677 = scmp.le.s32.totalorder 2, %s15
      // Predicated region
      $region53: #{tpu_custom_call.1} parent=5 // pred_check
        %p678 = pneg %p677
      $region54: #{tpu_custom_call.1} parent=5 // pred_check_branch
        %680 = sbr.rel (%p678) target = $region56
      $region55: #{tpu_custom_call.1} parent=5 // pred_region
        %s681 = ssub.s32 %s15, 2
        // Predicated region
        $region57: #{tpu_custom_call.1} parent=55 // pred_check
          %p682 = pneg %p191
        $region58: #{tpu_custom_call.1} parent=55 // pred_check_branch
          %684 = sbr.rel (%p682) target = $region60
        $region59: #{tpu_custom_call.1} parent=55 // pred_region
          %s685 = sand.u32 %s176, 1
          %s686 = scalar_lea.sflag [#allocation4], %s685
          %s687 = sand.u32 %s176, 1
          %s688 = smul.addr %s687, 8
          %s689 = scalar_lea.vmem [#allocation3], %s688
          %690 = dma.done %s686, 128
        $region60: #{tpu_custom_call.1} parent=55 // pred_fallthru
          _
      $region56: #{tpu_custom_call.1} parent=5 // pred_fallthru
        _
    $region6: #{tpu_custom_call.1} parent=1 // loop_footer
      %s19 = sadd.s32 1, %s15
    $region7: #{tpu_custom_call.1} parent=1 // loop_footer_branch
      %14 = sbr.rel target = $region3
    $region8: #{tpu_custom_call.1} parent=1 // loop_exit
      _
    %691 = vsyncpa [#allocation4], 1
    %s692 = scalar_lea.sflag [#allocation4], 1
    %693 = vsyncpa %s692, 1

</llo_original>
